<compile_context>
chip_gen: v7x
topology: tpu7x:2x2x1
jax: 0.10.0
libtpu: 0.0.40
codegen_flags: <defaults>
</compile_context>

<pallas_src>
import jax
import jax.numpy as jnp
from jax.experimental import pallas as pl
from jax.experimental.pallas import tpu as pltpu


def _identity_kernel(z_ref, o_ref):
    # Straight VMEM tile copy — identity semantics.
    o_ref[...] = z_ref[...]


def _pick_lane(size, last_dim):
    """Lane-dense last dim: largest of 512/256/128 dividing the element count."""
    for cand in (512, 256, 128):
        if size % cand == 0:
            return cand
    # Fallback: keep the original trailing dim (full-extent block stays legal).
    return last_dim


def _pick_tile_rows(rows, lane, itemsize):
    """Largest sublane-aligned row tile within a ~2 MiB-per-block budget."""
    # Sublane packing: 8 rows for 32-bit, 16 for 16-bit, 32 for 8-bit dtypes.
    sublane = max(8, 32 // max(itemsize, 1))
    budget_bytes = 2 * 1024 * 1024  # per block; x2 (in/out) x2 (dbl-buffer) ~ 8 MiB VMEM
    max_rows = max(budget_bytes // (lane * itemsize), sublane)
    max_rows = (max_rows // sublane) * sublane
    if rows > max_rows:
        # Multiple of sublane; pl.cdiv grid handles any remainder block.
        return max_rows
    # Whole array fits in one block; prefer two blocks when cleanly splittable
    # so the row axis can shard across v7x's 2 TensorCores.
    if rows % (2 * sublane) == 0:
        return rows // 2
    return rows  # full-extent block (always layout-legal)


def decoder_layer_forward(z):
    """Identity forward of DecoderLayer, run through a Pallas TPU kernel.

    z: any-shape array (NCHW for conv-style inputs). Returns an array with
    identical shape/dtype/values.
    """
    orig_shape = z.shape
    size = int(z.size)

    # Degenerate inputs: nothing to stream through a kernel.
    if size == 0 or z.ndim == 0:
        return z

    itemsize = jnp.dtype(z.dtype).itemsize
    lane = _pick_lane(size, orig_shape[-1])
    rows = size // lane
    z2 = z.reshape(rows, lane)

    tile_rows = _pick_tile_rows(rows, lane, itemsize)
    grid = (pl.cdiv(rows, tile_rows),)

    out2 = pl.pallas_call(
        _identity_kernel,
        out_shape=jax.ShapeDtypeStruct((rows, lane), z.dtype),
        grid_spec=pltpu.PrefetchScalarGridSpec(
            num_scalar_prefetch=0,
            grid=grid,
            in_specs=[pl.BlockSpec((tile_rows, lane), lambda i: (i, 0))],
            out_specs=pl.BlockSpec((tile_rows, lane), lambda i: (i, 0)),
        ),
        compiler_params=pltpu.CompilerParams(
            dimension_semantics=("parallel",),
        ),
        # Identity: write straight back into the (donated) input buffer —
        # removes the extra HBM output allocation / round-trip.
        input_output_aliases={0: 0},
    )(z2)

    return out2.reshape(orig_shape)


if __name__ == "__main__":
    key = jax.random.PRNGKey(0)
    # NCHW input consistent with a decoder layer: batch=2, channels=4, 16x16.
    z = jax.random.normal(key, (2, 4, 16, 16), dtype=jnp.float32)
    # Independent copy for verification (kernel input buffer may be donated).
    z_ref = jnp.array(z)

    out = decoder_layer_forward(z)
    out = jax.block_until_ready(out)

    # Verify identity semantics exactly.
    assert out.shape == z_ref.shape
    assert out.dtype == z_ref.dtype
    assert bool(jnp.all(out == z_ref))

    # Also exercise edge cases the review flagged (zero-size and scalar).
    assert decoder_layer_forward(jnp.zeros((0, 4), jnp.float32)).shape == (0, 4)
    assert bool(decoder_layer_forward(jnp.float32(3.5)) == jnp.float32(3.5))

    print("KERNEL_OK")
</pallas_src>

<mosaic_0001>
module attributes {stable_mosaic.version = 11 : i64} {
  func.func @_identity_kernel(%arg0: i32, %arg1: memref<4x512xf32, #tpu.memory_space<vmem>>, %arg2: memref<4x512xf32, #tpu.memory_space<vmem>>) attributes {dimension_semantics = [#tpu.dimension_semantics<parallel>], iteration_bounds = array<i64: 1>, scalar_prefetch = 0 : i64, scratch_operands = 0 : i64, tpu.core_type = #tpu.core_type<tc>, window_params = [{transform_indices = @transform_0, window_bounds = array<i64: 4, 512>}, {transform_indices = @transform_1, window_bounds = array<i64: 4, 512>}]} {
    %c0 = arith.constant 0 : index
    %c0_0 = arith.constant 0 : index
    %0 = vector.load %arg1[%c0, %c0_0] : memref<4x512xf32, #tpu.memory_space<vmem>>, vector<4x512xf32>
    %c0_1 = arith.constant 0 : index
    %c0_2 = arith.constant 0 : index
    %1 = vector.load %arg2[%c0_1, %c0_2] : memref<4x512xf32, #tpu.memory_space<vmem>>, vector<4x512xf32>
    tpu.vector_store %arg2[%c0_1, %c0_2], %0 {strides = array<i32>} : memref<4x512xf32, #tpu.memory_space<vmem>>, vector<4x512xf32>,
    return
  }
  func.func @transform_0(%arg0: i32) -> (i32, i32) {
    %c0_i32 = arith.constant 0 : i32
    %c0_i32_0 = arith.constant 0 : i32
    return %arg0, %c0_i32 : i32, i32
  }
  func.func @transform_1(%arg0: i32) -> (i32, i32) {
    %c0_i32 = arith.constant 0 : i32
    %c0_i32_0 = arith.constant 0 : i32
    return %arg0, %c0_i32 : i32, i32
  }
}

</mosaic_0001>

<llo_original>
// kernel: tpu_custom_call.1
$region0: #{tpu_custom_call.1}
  #allocation0 [shape = 'u32[]', space=smem, size = 0x4, offset = 0x4, fixed_abs, tag = 'smem constant byte address 0x4 - core index']
  #allocation1 [shape = 'u32[144,128]{1,0:T(1,128)}', space=vmem, size = 0x12000, scoped, tag = 'internal scratch']
  %s0 = inlined_call_operand.hbm [shape: f32[4,512], index: 0, kind: input, shape index: {}, may-alias: {0,1}]
  %s1 = inlined_call_operand.hbm [shape: f32[4,512], index: 1, kind: output, shape index: {}, may-alias: {0,1}]
  %s2 = sld [smem:[#allocation0]]
  $region18: #{tpu_custom_call.1} parent=0
    _
  %s4 = ssub.s32 1, %s2
  %s5 = scalar_select 0, %s4, %s2
  $region1: #{tpu_custom_call.1} parent=0
    #allocation2 [shape = 'u8[8192]{0}', space=vmem, size = 0x2000, scoped, tag = 'input window, operand 0, single buffered']
    #allocation3 [shape = 's32[1]{0}', space=sflag, size = 0x4, scoped, tag = 'scoped memory for tpu_custom_call.1']
    #allocation4 [shape = 's32[1]{0}', space=sflag, size = 0x4, scoped, tag = 'scoped memory for tpu_custom_call.1']
    #allocation5 [shape = 'u8[8192]{0}', space=vmem, size = 0x2000, scoped, tag = 'output window, operand 0, single buffered']
    %6 = vsyncpa [#allocation3], 0
    %7 = vsyncpa [#allocation4], 0
    // Predicated region
    $region2: #{tpu_custom_call.1} parent=1 // pred_check
      _
    $region3: #{tpu_custom_call.1} parent=1 // pred_check_branch
      %9 = sbr.rel (0) target = $region5
    $region4: #{tpu_custom_call.1} parent=1 // pred_region
      %s11 = ssub.s32 256, 256
      %12 = vsyncadd [#allocation3], %s11
      %s14 = sshll.u32 [#allocation2], 4
      %s15 = int_to_ptr.vmem [resolvable:$true] %s14
      %17 = dma.hbm_to_vmem [thread:$0]  %s0, 256, %s15, [#allocation3]
    $region5: #{tpu_custom_call.1} parent=1 // pred_fallthru
      _
    // Predicated region
    $region6: #{tpu_custom_call.1} parent=1 // pred_check
      _
    $region7: #{tpu_custom_call.1} parent=1 // pred_check_branch
      %19 = sbr.rel (0) target = $region9
    $region8: #{tpu_custom_call.1} parent=1 // pred_region
      %20 = dma.done [#allocation3], 256
    $region9: #{tpu_custom_call.1} parent=1 // pred_fallthru
      _
    %v21 = vld [vmem:[#allocation2] sm:$0xff]
    %v22 = vld [vmem:[#allocation2 + $0x8] sm:$0xff]
    %23 = vst [vmem:[#allocation5] sm:$0xff] %v21
    %24 = vst [vmem:[#allocation5 + $0x8] sm:$0xff] %v22
    // Predicated region
    $region10: #{tpu_custom_call.1} parent=1 // pred_check
      _
    $region11: #{tpu_custom_call.1} parent=1 // pred_check_branch
      %26 = sbr.rel (0) target = $region13
    $region12: #{tpu_custom_call.1} parent=1 // pred_region
      %s28 = ssub.s32 256, 256
      %29 = vsyncadd [#allocation4], %s28
      %s31 = sshll.u32 [#allocation5], 4
      %s32 = int_to_ptr.vmem [resolvable:$true] %s31
      %34 = dma.vmem_to_hbm [thread:$0]  %s32, 256, %s1, [#allocation4]
    $region13: #{tpu_custom_call.1} parent=1 // pred_fallthru
      _
    // Predicated region
    $region14: #{tpu_custom_call.1} parent=1 // pred_check
      _
    $region15: #{tpu_custom_call.1} parent=1 // pred_check_branch
      %36 = sbr.rel (0) target = $region17
    $region16: #{tpu_custom_call.1} parent=1 // pred_region
      %37 = dma.done [#allocation4], 256
    $region17: #{tpu_custom_call.1} parent=1 // pred_fallthru
      _
    %38 = vsyncpa [#allocation3], 1
    %39 = vsyncpa [#allocation4], 1

</llo_original>
